<compile_context>
chip_gen: v5e
topology: v5e:2x2
jax: 0.10.0
libtpu: 0.0.40
codegen_flags: <defaults>
</compile_context>

<pallas_src>
import functools

import jax
import jax.numpy as jnp
from jax.experimental import pallas as pl
from jax.experimental.pallas import tpu as pltpu


def _round_up(x, m):
    return (x + m - 1) // m * m


def _cdiv(a, b):
    return (a + b - 1) // b


def _vmem_capacity_bytes():
    try:
        return int(pltpu.get_tpu_info().vmem_capacity_bytes)
    except Exception:
        return 64 * 1024 * 1024  # conservative: v7x per-TC physical VMEM


def _pick_hw_tile(C, itemsize, HW, requested, vmem_cap):
    """Spatial tile (lanes): VMEM-budget derived, 128-aligned, capped by HW."""
    hw_pad128 = _round_up(max(HW, 1), 128)
    if requested is not None:
        return max(128, min((requested // 128) * 128, hw_pad128))
    # ~1/8 of scoped VMEM for one x block (double-buffered input + resident
    # weights + scratch + headroom), capped at 4 MiB to keep the unrolled
    # 128-lane slice loop short.
    target_bytes = min(vmem_cap // 8, 4 * 1024 * 1024)
    hw_tile = (target_bytes // max(C * itemsize, 1)) // 128 * 128
    return max(128, min(hw_tile, hw_pad128, 16384))


def _accum_slices(x_ref, sum_acc, max_acc, n_slices, valid_cols):
    """Accumulate one (1, C, hw_tile) VMEM block into lane-wide running stats.

    Static 128-lane slices of the block (no relayout) -> pure VPU add/max.
    `valid_cols` is the static count of non-padded columns in this tile:
    zero-padded columns are sum-neutral; fully-padded slices are skipped
    entirely; the single partially-valid slice gets a -inf mask on the max
    path only.
    """
    s = sum_acc[...]
    m = max_acc[...]
    for i in range(n_slices):
        lo = i * 128
        if lo >= valid_cols:
            break  # remaining slices are pure padding
        c = x_ref[:, :, lo:lo + 128].astype(jnp.float32)  # (1, C, 128)
        s = s + c  # zero padding is sum-neutral
        if lo + 128 <= valid_cols:
            m = jnp.maximum(m, c)
        else:
            lane = jax.lax.broadcasted_iota(jnp.int32, c.shape, 2)
            m = jnp.maximum(m, jnp.where(lane < (valid_cols - lo), c, -jnp.inf))
    sum_acc[...] = s
    max_acc[...] = m


def _channel_attention_kernel(x_ref, w1t_ref, w2t_ref, o_ref,
                              sum_acc, max_acc, *, hw_true, hw_tile):
    # x_ref:   (1, C, hw_tile)  current batch row / spatial tile
    # w1t_ref: (C, Ch)          fc1 weight, transposed (resident)
    # w2t_ref: (Ch, C_pad)      fc2 weight, transposed + lane-padded (resident)
    # o_ref:   (1, 1, C_pad)    sigmoid attention for this batch row
    # sum_acc / max_acc: (1, C, 128) f32 lane-wide partial accumulators
    k = pl.program_id(1)
    nk = pl.num_programs(1)

    @pl.when(k == 0)
    def _init():
        sum_acc[...] = jnp.zeros_like(sum_acc)
        max_acc[...] = jnp.full_like(max_acc, -jnp.inf)

    n_slices = hw_tile // 128
    rem = hw_true % hw_tile

    if rem == 0:
        # No ragged tail anywhere: every tile accumulates unmasked.
        _accum_slices(x_ref, sum_acc, max_acc, n_slices, hw_tile)
    else:
        # Only the last tile carries padding: gate the masked path to it.
        @pl.when(k < nk - 1)
        def _full():
            _accum_slices(x_ref, sum_acc, max_acc, n_slices, hw_tile)

        @pl.when(k == nk - 1)
        def _tail():
            _accum_slices(x_ref, sum_acc, max_acc, n_slices, rem)

    @pl.when(k == nk - 1)
    def _finalize():
        # Single cross-lane (XLU) reduce, then the fused shared MLP.
        avg = jnp.sum(sum_acc[...], axis=-1) / jnp.float32(hw_true)   # (1, C)
        mx = jnp.max(max_acc[...], axis=-1)                           # (1, C)
        p = jnp.concatenate([avg, mx], axis=0)                        # (2, C)
        w1t = w1t_ref[...].astype(jnp.float32)                        # (C, Ch)
        w2t = w2t_ref[...].astype(jnp.float32)                        # (Ch, C_pad)
        h = jnp.maximum(
            jnp.dot(p, w1t, preferred_element_type=jnp.float32), 0.0)
        out2 = jnp.dot(h, w2t, preferred_element_type=jnp.float32)    # (2, C_pad)
        res = out2[0:1] + out2[1:2]                                   # (1, C_pad)
        o_ref[...] = jax.nn.sigmoid(res)[None].astype(o_ref.dtype)


def _channel_attention_partial_kernel(x_ref, psum_ref, pmax_ref,
                                      sum_acc, max_acc,
                                      *, hw_true, hw_tile, tiles_per_split):
    # Spatial-split variant (v7x megacore, small B): emits per-(b, split)
    # pooled partial sum / max; combine + MLP + sigmoid happen in a tiny
    # XLA epilogue.
    s = pl.program_id(1)
    k = pl.program_id(2)
    nk = pl.num_programs(2)

    @pl.when(k == 0)
    def _init():
        sum_acc[...] = jnp.zeros_like(sum_acc)
        max_acc[...] = jnp.full_like(max_acc, -jnp.inf)

    g = s * tiles_per_split + k          # global spatial tile index
    full_tiles = hw_true // hw_tile      # number of fully valid tiles
    rem = hw_true % hw_tile
    n_slices = hw_tile // 128

    @pl.when(g < full_tiles)
    def _full():
        _accum_slices(x_ref, sum_acc, max_acc, n_slices, hw_tile)

    if rem != 0:
        @pl.when(g == full_tiles)
        def _tail():
            _accum_slices(x_ref, sum_acc, max_acc, n_slices, rem)
    # Tiles with g past the ragged tile are pure padding: skipped entirely.

    @pl.when(k == nk - 1)
    def _finalize():
        psum_ref[...] = jnp.sum(sum_acc[...], axis=-1)[None]   # (1, 1, C)
        pmax_ref[...] = jnp.max(max_acc[...], axis=-1)[None]   # (1, 1, C)


def channel_attention(x, w1, w2, *, hw_tile=None, spatial_splits=None):
    """x: (B, C, H, W); w1: (Ch, C) = fc1 1x1-conv weight; w2: (C, Ch) = fc2.
    Returns sigmoid channel attention of shape (B, C, 1, 1)."""
    B, C, H, W = x.shape
    Ch = w1.shape[0]
    HW = H * W
    itemsize = jnp.dtype(x.dtype).itemsize
    vmem_cap = _vmem_capacity_bytes()

    hw_tile = _pick_hw_tile(C, itemsize, HW, hw_tile, vmem_cap)
    n_tiles = _cdiv(HW, hw_tile)

    if spatial_splits is None:
        # With B == 1 the batch grid axis cannot feed both v7x TensorCores;
        # split the spatial reduction instead (harmless on single-TC chips).
        spatial_splits = 2 if (B == 1 and n_tiles >= 2) else 1
    spatial_splits = max(1, min(spatial_splits, n_tiles))

    n_tiles_total = _round_up(n_tiles, spatial_splits)
    tiles_per_split = n_tiles_total // spatial_splits
    hw_total = n_tiles_total * hw_tile

    x_flat = x.reshape(B, C, HW)
    if hw_total != HW:
        x_flat = jnp.pad(x_flat, ((0, 0), (0, 0), (0, hw_total - HW)))

    # Lane-dense output channels for the fused path.
    c_pad = _round_up(max(C, 128), 128)

    # Generation-aware scoped VMEM limit (≈5/8 of physical per-TC VMEM:
    # ~40 MiB on v7x, ~80 MiB on v5e/v6e), with headroom over the estimate.
    est = (2 * C * hw_tile * itemsize                      # double-buffered x
           + C * Ch * jnp.dtype(w1.dtype).itemsize         # resident fc1
           + Ch * c_pad * jnp.dtype(w2.dtype).itemsize     # resident fc2
           + 2 * C * 128 * 4                               # accumulators
           + 4 * c_pad * 4)                                # output block(s)
    vmem_limit = int(min(max(4 * est, 32 * 1024 * 1024), vmem_cap * 5 // 8))
    vmem_limit = max(vmem_limit, 2 * est)

    if spatial_splits == 1:
        w1t = w1.T                                           # (C, Ch)
        w2t = jnp.pad(w2.T, ((0, 0), (0, c_pad - C)))        # (Ch, C_pad)
        kernel = functools.partial(
            _channel_attention_kernel, hw_true=HW, hw_tile=hw_tile)

        out = pl.pallas_call(
            kernel,
            out_shape=jax.ShapeDtypeStruct((B, 1, c_pad), x.dtype),
            grid_spec=pltpu.PrefetchScalarGridSpec(
                num_scalar_prefetch=0,
                grid=(B, n_tiles_total),
                in_specs=[
                    pl.BlockSpec((1, C, hw_tile), lambda b, k: (b, 0, k)),
                    pl.BlockSpec((C, Ch), lambda b, k: (0, 0)),      # resident
                    pl.BlockSpec((Ch, c_pad), lambda b, k: (0, 0)),  # resident
                ],
                out_specs=pl.BlockSpec((1, 1, c_pad), lambda b, k: (b, 0, 0)),
                scratch_shapes=[
                    pltpu.VMEM((1, C, 128), jnp.float32),   # running sum
                    pltpu.VMEM((1, C, 128), jnp.float32),   # running max
                ],
            ),
            compiler_params=pltpu.CompilerParams(
                dimension_semantics=("parallel", "arbitrary"),
                vmem_limit_bytes=vmem_limit,
            ),
        )(x_flat, w1t, w2t)
        return out[:, 0, :C].reshape(B, C, 1, 1)

    # ---------------- spatial-split path (v7x megacore, small B) -----------
    S = spatial_splits
    kernel = functools.partial(
        _channel_attention_partial_kernel,
        hw_true=HW, hw_tile=hw_tile, tiles_per_split=tiles_per_split)

    psum, pmax = pl.pallas_call(
        kernel,
        out_shape=(jax.ShapeDtypeStruct((B * S, 1, C), jnp.float32),
                   jax.ShapeDtypeStruct((B * S, 1, C), jnp.float32)),
        grid_spec=pltpu.PrefetchScalarGridSpec(
            num_scalar_prefetch=0,
            grid=(B, S, tiles_per_split),
            in_specs=[
                pl.BlockSpec((1, C, hw_tile),
                             lambda b, s, k: (b, 0, s * tiles_per_split + k)),
            ],
            out_specs=(
                pl.BlockSpec((1, 1, C), lambda b, s, k: (b * S + s, 0, 0)),
                pl.BlockSpec((1, 1, C), lambda b, s, k: (b * S + s, 0, 0)),
            ),
            scratch_shapes=[
                pltpu.VMEM((1, C, 128), jnp.float32),   # running sum
                pltpu.VMEM((1, C, 128), jnp.float32),   # running max
            ],
        ),
        compiler_params=pltpu.CompilerParams(
            dimension_semantics=("parallel", "parallel", "arbitrary"),
            vmem_limit_bytes=vmem_limit,
        ),
    )(x_flat)

    # Tiny XLA epilogue: combine per-core partials, shared MLP, sigmoid.
    avg = psum.reshape(B, S, C).sum(axis=1) / jnp.float32(HW)
    mx = pmax.reshape(B, S, C).max(axis=1)
    w1f = w1.astype(jnp.float32)
    w2f = w2.astype(jnp.float32)
    mlp = lambda p: jnp.maximum(p @ w1f.T, 0.0) @ w2f.T
    att = jax.nn.sigmoid(mlp(avg) + mlp(mx)).astype(x.dtype)
    return att.reshape(B, C, 1, 1)


def _reference(x, w1, w2):
    avg = jnp.mean(x, axis=(2, 3))
    mx = jnp.max(x, axis=(2, 3))
    mlp = lambda p: jnp.maximum(p @ w1.T, 0.0) @ w2.T
    return jax.nn.sigmoid(mlp(avg) + mlp(mx)).reshape(
        x.shape[0], x.shape[1], 1, 1)


if __name__ == "__main__":
    # in_planes must divide by ratio=16.
    B, C, ratio = 2, 64, 16
    Ch = C // ratio  # hidden channels = 4

    key = jax.random.PRNGKey(0)
    kx1, kx2, kx3, kx4, k1, k2 = jax.random.split(key, 6)

    # Conv2d weight shapes (out, in, 1, 1) squeezed.
    w1 = jax.random.normal(k1, (Ch, C), dtype=jnp.float32) * 0.1  # fc1
    w2 = jax.random.normal(k2, (C, Ch), dtype=jnp.float32) * 0.1  # fc2

    # 1) Multi-tile accumulation across the spatial grid axis (forced small
    #    tile), no ragged tail.
    x1 = jax.random.normal(kx1, (B, C, 16, 16), dtype=jnp.float32)
    out1 = channel_attention(x1, w1, w2, hw_tile=128)
    jax.block_until_ready(out1)
    assert jnp.allclose(out1, _reference(x1, w1, w2), atol=1e-5, rtol=1e-5), \
        "mismatch (case 1)"

    # 2) Auto (VMEM-derived) tile; H*W = 143 -> single ragged tile, exercises
    #    the statically-masked tail (max path) with the sum mask removed.
    x2 = jax.random.normal(kx2, (B, C, 13, 11), dtype=jnp.float32)
    out2 = channel_attention(x2, w1, w2)
    jax.block_until_ready(out2)
    assert jnp.allclose(out2, _reference(x2, w1, w2), atol=1e-5, rtol=1e-5), \
        "mismatch (case 2)"

    # 3) Multi-tile with a ragged last tile (H*W = 400, tile 128): exercises
    #    the pl.when gating of the masked path to the final tile only.
    x3 = jax.random.normal(kx3, (B, C, 20, 20), dtype=jnp.float32)
    out3 = channel_attention(x3, w1, w2, hw_tile=128)
    jax.block_until_ready(out3)
    assert jnp.allclose(out3, _reference(x3, w1, w2), atol=1e-5, rtol=1e-5), \
        "mismatch (case 3)"

    # 4) B == 1 -> spatial split across TensorCores (v7x megacore path) with a
    #    ragged tail, partial-pool outputs, and the XLA combine/MLP epilogue.
    x4 = jax.random.normal(kx4, (1, C, 48, 40), dtype=jnp.float32)
    out4 = channel_attention(x4, w1, w2, hw_tile=512)
    jax.block_until_ready(out4)
    assert jnp.allclose(out4, _reference(x4, w1, w2), atol=1e-5, rtol=1e-5), \
        "mismatch (case 4)"

    print("KERNEL_OK")
</pallas_src>

<mosaic_0001>
module attributes {stable_mosaic.version = 11 : i64} {
  func.func @_channel_attention_kernel(%arg0: i32, %arg1: i32, %arg2: memref<1x64x128xf32, #tpu.memory_space<vmem>>, %arg3: memref<64x4xf32, #tpu.memory_space<vmem>>, %arg4: memref<4x128xf32, #tpu.memory_space<vmem>>, %arg5: memref<1x1x128xf32, #tpu.memory_space<vmem>>, %arg6: memref<1x64x128xf32, #tpu.memory_space<vmem>>, %arg7: memref<1x64x128xf32, #tpu.memory_space<vmem>>) attributes {dimension_semantics = [#tpu.dimension_semantics<parallel>, #tpu.dimension_semantics<arbitrary>], iteration_bounds = array<i64: 2, 2>, scalar_prefetch = 0 : i64, scratch_operands = 2 : i64, tpu.core_type = #tpu.core_type<tc>, window_params = [{transform_indices = @transform_0, window_bounds = array<i64: 1, 64, 128>}, {pipeline_mode = #tpu.pipeline_mode<synchronous>, transform_indices = @transform_1, window_bounds = array<i64: 64, 4>}, {pipeline_mode = #tpu.pipeline_mode<synchronous>, transform_indices = @transform_2, window_bounds = array<i64: 4, 128>}, {transform_indices = @transform_3, window_bounds = array<i64: 1, 1, 128>}]} {
    %c0_i32 = arith.constant 0 : i32
    %0 = arith.cmpi eq, %arg1, %c0_i32 : i32
    %1 = arith.extui %0 : i1 to i32
    %c0_i32_0 = arith.constant 0 : i32
    %2 = arith.cmpi ne, %1, %c0_i32_0 : i32
    scf.if %2 {
      %cst = arith.constant 0.000000e+00 : f32
      %13 = vector.broadcast %cst : f32 to vector<1x64x128xf32>
      %c0_16 = arith.constant 0 : index
      %c0_17 = arith.constant 0 : index
      %c0_18 = arith.constant 0 : index
      %14 = vector.load %arg6[%c0_16, %c0_17, %c0_18] : memref<1x64x128xf32, #tpu.memory_space<vmem>>, vector<1x64x128xf32>
      tpu.vector_store %arg6[%c0_16, %c0_17, %c0_18], %13 {strides = array<i32>} : memref<1x64x128xf32, #tpu.memory_space<vmem>>, vector<1x64x128xf32>,
      %cst_19 = arith.constant 0xFF800000 : f32
      %15 = vector.broadcast %cst_19 : f32 to vector<1x64x128xf32>
      %c0_20 = arith.constant 0 : index
      %c0_21 = arith.constant 0 : index
      %c0_22 = arith.constant 0 : index
      %16 = vector.load %arg7[%c0_20, %c0_21, %c0_22] : memref<1x64x128xf32, #tpu.memory_space<vmem>>, vector<1x64x128xf32>
      tpu.vector_store %arg7[%c0_20, %c0_21, %c0_22], %15 {strides = array<i32>} : memref<1x64x128xf32, #tpu.memory_space<vmem>>, vector<1x64x128xf32>,
    } else {
    }
    %c0 = arith.constant 0 : index
    %c0_1 = arith.constant 0 : index
    %c0_2 = arith.constant 0 : index
    %3 = vector.load %arg6[%c0, %c0_1, %c0_2] : memref<1x64x128xf32, #tpu.memory_space<vmem>>, vector<1x64x128xf32>
    %c0_3 = arith.constant 0 : index
    %c0_4 = arith.constant 0 : index
    %c0_5 = arith.constant 0 : index
    %4 = vector.load %arg7[%c0_3, %c0_4, %c0_5] : memref<1x64x128xf32, #tpu.memory_space<vmem>>, vector<1x64x128xf32>
    %c0_6 = arith.constant 0 : index
    %c0_7 = arith.constant 0 : index
    %c0_8 = arith.constant 0 : index
    %5 = vector.load %arg2[%c0_6, %c0_7, %c0_8] : memref<1x64x128xf32, #tpu.memory_space<vmem>>, vector<1x64x128xf32>
    %6 = arith.addf %3, %5 : vector<1x64x128xf32>
    %7 = arith.maximumf %4, %5 : vector<1x64x128xf32>
    %c0_9 = arith.constant 0 : index
    %c0_10 = arith.constant 0 : index
    %c0_11 = arith.constant 0 : index
    %8 = vector.load %arg6[%c0_9, %c0_10, %c0_11] : memref<1x64x128xf32, #tpu.memory_space<vmem>>, vector<1x64x128xf32>
    tpu.vector_store %arg6[%c0_9, %c0_10, %c0_11], %6 {strides = array<i32>} : memref<1x64x128xf32, #tpu.memory_space<vmem>>, vector<1x64x128xf32>,
    %c0_12 = arith.constant 0 : index
    %c0_13 = arith.constant 0 : index
    %c0_14 = arith.constant 0 : index
    %9 = vector.load %arg7[%c0_12, %c0_13, %c0_14] : memref<1x64x128xf32, #tpu.memory_space<vmem>>, vector<1x64x128xf32>
    tpu.vector_store %arg7[%c0_12, %c0_13, %c0_14], %7 {strides = array<i32>} : memref<1x64x128xf32, #tpu.memory_space<vmem>>, vector<1x64x128xf32>,
    %c1_i32 = arith.constant 1 : i32
    %10 = arith.cmpi eq, %arg1, %c1_i32 : i32
    %11 = arith.extui %10 : i1 to i32
    %c0_i32_15 = arith.constant 0 : i32
    %12 = arith.cmpi ne, %11, %c0_i32_15 : i32
    scf.if %12 {
      %c0_16 = arith.constant 0 : index
      %c0_17 = arith.constant 0 : index
      %c0_18 = arith.constant 0 : index
      %13 = vector.load %arg6[%c0_16, %c0_17, %c0_18] : memref<1x64x128xf32, #tpu.memory_space<vmem>>, vector<1x64x128xf32>
      %cst = arith.constant dense<0.000000e+00> : vector<1x64xf32>
      %14 = vector.multi_reduction <add>, %13, %cst [2] : vector<1x64x128xf32> to vector<1x64xf32>
      %cst_19 = arith.constant 2.560000e+02 : f32
      %15 = vector.broadcast %cst_19 : f32 to vector<1x64xf32>
      %16 = arith.divf %14, %15 : vector<1x64xf32>
      %c0_20 = arith.constant 0 : index
      %c0_21 = arith.constant 0 : index
      %c0_22 = arith.constant 0 : index
      %17 = vector.load %arg7[%c0_20, %c0_21, %c0_22] : memref<1x64x128xf32, #tpu.memory_space<vmem>>, vector<1x64x128xf32>
      %cst_23 = arith.constant dense<0xFF800000> : vector<1x64xf32>
      %18 = vector.multi_reduction <maximumf>, %17, %cst_23 [2] : vector<1x64x128xf32> to vector<1x64xf32>
      %19 = tpu.concatenate %16, %18 in 0 : vector<1x64xf32>, vector<1x64xf32> -> vector<2x64xf32>
      %c0_24 = arith.constant 0 : index
      %c0_25 = arith.constant 0 : index
      %20 = vector.load %arg3[%c0_24, %c0_25] : memref<64x4xf32, #tpu.memory_space<vmem>>, vector<64x4xf32>
      %c0_26 = arith.constant 0 : index
      %c0_27 = arith.constant 0 : index
      %21 = vector.load %arg4[%c0_26, %c0_27] : memref<4x128xf32, #tpu.memory_space<vmem>>, vector<4x128xf32>
      %cst_28 = arith.constant dense<0.000000e+00> : vector<2x4xf32>
      %22 = tpu.matmul %19, %20, %cst_28 {dimension_numbers = #tpu.dot_dimension_numbers<[1], [0], [0], [1], [0, 0, 1, 1], [], []>} : vector<2x64xf32>, vector<64x4xf32>, vector<2x4xf32> -> vector<2x4xf32>
      %cst_29 = arith.constant 0.000000e+00 : f32
      %23 = vector.broadcast %cst_29 : f32 to vector<2x4xf32>
      %24 = arith.maximumf %22, %23 : vector<2x4xf32>
      %cst_30 = arith.constant dense<0.000000e+00> : vector<2x128xf32>
      %25 = tpu.matmul %24, %21, %cst_30 {dimension_numbers = #tpu.dot_dimension_numbers<[1], [0], [0], [1], [0, 0, 1, 1], [], []>} : vector<2x4xf32>, vector<4x128xf32>, vector<2x128xf32> -> vector<2x128xf32>
      %26 = vector.extract_strided_slice %25 {offsets = [0, 0], sizes = [1, 128], strides = [1, 1]} : vector<2x128xf32> to vector<1x128xf32>
      %27 = vector.extract_strided_slice %25 {offsets = [1, 0], sizes = [1, 128], strides = [1, 1]} : vector<2x128xf32> to vector<1x128xf32>
      %28 = arith.addf %26, %27 : vector<1x128xf32>
      %29 = arith.negf %28 : vector<1x128xf32>
      %30 = math.exp %29 : vector<1x128xf32>
      %cst_31 = arith.constant 1.000000e+00 : f32
      %31 = vector.broadcast %cst_31 : f32 to vector<1x128xf32>
      %32 = arith.addf %31, %30 : vector<1x128xf32>
      %33 = arith.divf %31, %32 : vector<1x128xf32>
      %34 = vector.shape_cast %33 : vector<1x128xf32> to vector<1x1x128xf32>
      %c0_32 = arith.constant 0 : index
      %c0_33 = arith.constant 0 : index
      %c0_34 = arith.constant 0 : index
      %35 = vector.load %arg5[%c0_32, %c0_33, %c0_34] : memref<1x1x128xf32, #tpu.memory_space<vmem>>, vector<1x1x128xf32>
      tpu.vector_store %arg5[%c0_32, %c0_33, %c0_34], %34 {strides = array<i32>} : memref<1x1x128xf32, #tpu.memory_space<vmem>>, vector<1x1x128xf32>,
    } else {
    }
    return
  }
  func.func @transform_0(%arg0: i32, %arg1: i32) -> (i32, i32, i32) {
    %c0_i32 = arith.constant 0 : i32
    %c0_i32_0 = arith.constant 0 : i32
    return %arg0, %c0_i32, %arg1 : i32, i32, i32
  }
  func.func @transform_1(%arg0: i32, %arg1: i32) -> (i32, i32) {
    %c0_i32 = arith.constant 0 : i32
    %c0_i32_0 = arith.constant 0 : i32
    %c0_i32_1 = arith.constant 0 : i32
    return %c0_i32, %c0_i32_0 : i32, i32
  }
  func.func @transform_2(%arg0: i32, %arg1: i32) -> (i32, i32) {
    %c0_i32 = arith.constant 0 : i32
    %c0_i32_0 = arith.constant 0 : i32
    %c0_i32_1 = arith.constant 0 : i32
    return %c0_i32, %c0_i32_0 : i32, i32
  }
  func.func @transform_3(%arg0: i32, %arg1: i32) -> (i32, i32, i32) {
    %c0_i32 = arith.constant 0 : i32
    %c0_i32_0 = arith.constant 0 : i32
    %c0_i32_1 = arith.constant 0 : i32
    return %arg0, %c0_i32, %c0_i32_0 : i32, i32, i32
  }
}

</mosaic_0001>

<llo_original>
// kernel: tpu_custom_call.1
$region0: #{tpu_custom_call.1}
  #allocation0 [shape = 'u32[]', space=smem, size = 0x4, offset = 0x4, fixed_abs, tag = 'smem constant byte address 0x4 - core index']
  #allocation1 [shape = 'u32[72,128]{1,0:T(1,128)}', space=vmem, size = 0x9000, scoped, tag = 'internal scratch']
  #allocation2 [shape = 'f32[1,64,128]{2,1,0:T(8,128)}', space=vmem, size = 0x8000, scoped, tag = 'scratch operand']
  #allocation3 [shape = 'f32[1,64,128]{2,1,0:T(8,128)}', space=vmem, size = 0x8000, scoped, tag = 'scratch operand']
  %s0 = inlined_call_operand.hbm [shape: f32[2,64,256], index: 0, kind: input, shape index: {}]
  %s1 = inlined_call_operand.vmem [shape: f32[64,4], index: 1, kind: input, shape index: {}]
  %s2 = inlined_call_operand.vmem [shape: f32[4,128], index: 2, kind: input, shape index: {}]
  %s3 = inlined_call_operand.hbm [shape: f32[2,1,128], index: 3, kind: output, shape index: {}]
  %s4 = sld [smem:[#allocation0]]
  $region57: #{tpu_custom_call.1} parent=0
    _
  %s6 = ssub.s32 1, %s4
  %s7 = scalar_select 0, %s6, %s4
  $region1: #{tpu_custom_call.1} parent=0
    #allocation4 [shape = 'u8[65536]{0}', space=vmem, size = 0x10000, scoped, tag = 'input window, operand 0']
    #allocation5 [shape = 's32[2]{0}', space=sflag, size = 0x8, scoped, tag = 'scoped memory for tpu_custom_call.1']
    #allocation6 [shape = 's32[2]{0}', space=sflag, size = 0x8, scoped, tag = 'scoped memory for tpu_custom_call.1']
    #allocation7 [shape = 'u8[1024]{0}', space=vmem, size = 0x400, scoped, tag = 'output window, operand 0']
    %8 = vsyncpa [#allocation5], 0
    %s9 = scalar_lea.sflag [#allocation5], 1
    %10 = vsyncpa %s9, 0
    %11 = vsyncpa [#allocation6], 0
    %s12 = scalar_lea.sflag [#allocation6], 1
    %13 = vsyncpa %s12, 0
    loop: start=0, step=1, limit=6
    $region2: #{tpu_custom_call.1} parent=1 // loop_pre_header
      _
    $region3: #{tpu_custom_call.1} parent=1 // loop_header
      %s15 = sphi 0, %s19
      %p16 = scmp.ge.s32.totalorder %s15, 6
      %s22 = sphi 0, %s34
      %s23 = sphi 0, %s30
      %s24 = sphi 0, %s22
      %s25 = sphi 0, %s23
      %s26 = sphi 0, %s24
      %s27 = sphi 0, %s25
      %s39 = sphi 0, %s41
      %s42 = sphi 0, %s39
      %s43 = sphi 0, %s42
      %s59 = sphi 0, %s43
      %s63 = sphi 0, %s63
      %s65 = sphi 0, %s63
      %s66 = sphi 0, %s65
      %s80 = sphi 0, %s66
      %s84 = sphi 0, %s84
      %s86 = sphi 0, %s84
      %s87 = sphi 0, %s86
      %s101 = sphi 0, %s87
      %s107 = sphi 0, %s109
      %s110 = sphi 0, %s107
      %s111 = sphi 0, %s110
      %s127 = sphi 0, %s111
    $region4: #{tpu_custom_call.1} parent=1 // loop_header_branch
      %18 = sbr.rel (%p16) target = $region8
    $region5: #{tpu_custom_call.1} parent=1 // loop_body
      %s20 = ssub.s32 %s15, 1
      %s21 = ssub.s32 %s15, 2
      %s28 = sadd.s32 1, %s23
      %p29 = scmp.ge.s32.totalorder %s28, 2
      %s30 = scalar_select %p29, 0, %s28
      %s31 = sadd.s32 1, %s22
      %s32 = scalar_select %p29, %s31, %s22
      %p33 = scmp.ge.s32.totalorder %s32, 2
      %s34 = scalar_select %p33, 0, %s32
      %s35 = ssub.s32 %s22, %s34
      %s36 = ssub.s32 %s23, %s30
      %s37 = sor.u32 %s35, %s36
      %p38 = scmp.eq.s32.totalorder %s37, 0
      %s40 = sadd.s32 %s39, 1
      %s41 = scalar_select %p38, %s39, %s40
      %p44 = pneg %p38
      %p45 = scmp.eq.s32.totalorder %s15, 3
      %p46 = por %p44, %p45
      %p47 = scmp.ne.s32.totalorder %s39, %s42
      %p48 = scmp.eq.s32.totalorder %s15, 0
      %p49 = por %p47, %p48
      %p50 = scmp.ne.s32.totalorder %s39, %s42
      %p51 = scmp.eq.s32.totalorder %s20, 3
      %p52 = por %p50, %p51
      %p53 = scmp.ne.s32.totalorder %s42, %s43
      %p54 = scmp.eq.s32.totalorder %s20, 0
      %p55 = por %p53, %p54
      %p56 = scmp.ne.s32.totalorder %s42, %s43
      %p57 = scmp.eq.s32.totalorder %s21, 3
      %p58 = por %p56, %p57
      %p60 = scmp.ne.s32.totalorder %s43, %s59
      %p61 = scmp.eq.s32.totalorder %s21, 0
      %p62 = por %p60, %p61
      %s64 = sadd.s32 %s63, 1
      %p67 = scmp.eq.s32.totalorder %s15, 3
      %p68 = scmp.ne.s32.totalorder %s63, %s65
      %p69 = scmp.eq.s32.totalorder %s15, 0
      %p70 = por %p68, %p69
      %p71 = scmp.ne.s32.totalorder %s63, %s65
      %p72 = scmp.eq.s32.totalorder %s20, 3
      %p73 = por %p71, %p72
      %p74 = scmp.ne.s32.totalorder %s65, %s66
      %p75 = scmp.eq.s32.totalorder %s20, 0
      %p76 = por %p74, %p75
      %p77 = scmp.ne.s32.totalorder %s65, %s66
      %p78 = scmp.eq.s32.totalorder %s21, 3
      %p79 = por %p77, %p78
      %p81 = scmp.ne.s32.totalorder %s66, %s80
      %p82 = scmp.eq.s32.totalorder %s21, 0
      %p83 = por %p81, %p82
      %s85 = sadd.s32 %s84, 1
      %p88 = scmp.eq.s32.totalorder %s15, 3
      %p89 = scmp.ne.s32.totalorder %s84, %s86
      %p90 = scmp.eq.s32.totalorder %s15, 0
      %p91 = por %p89, %p90
      %p92 = scmp.ne.s32.totalorder %s84, %s86
      %p93 = scmp.eq.s32.totalorder %s20, 3
      %p94 = por %p92, %p93
      %p95 = scmp.ne.s32.totalorder %s86, %s87
      %p96 = scmp.eq.s32.totalorder %s20, 0
      %p97 = por %p95, %p96
      %p98 = scmp.ne.s32.totalorder %s86, %s87
      %p99 = scmp.eq.s32.totalorder %s21, 3
      %p100 = por %p98, %p99
      %p102 = scmp.ne.s32.totalorder %s87, %s101
      %p103 = scmp.eq.s32.totalorder %s21, 0
      %p104 = por %p102, %p103
      %s105 = ssub.s32 %s22, %s34
      %p106 = scmp.eq.s32.totalorder %s105, 0
      %s108 = sadd.s32 %s107, 1
      %s109 = scalar_select %p106, %s107, %s108
      %p112 = pneg %p106
      %p113 = scmp.eq.s32.totalorder %s15, 3
      %p114 = por %p112, %p113
      %p115 = scmp.ne.s32.totalorder %s107, %s110
      %p116 = scmp.eq.s32.totalorder %s15, 0
      %p117 = por %p115, %p116
      %p118 = scmp.ne.s32.totalorder %s107, %s110
      %p119 = scmp.eq.s32.totalorder %s20, 3
      %p120 = por %p118, %p119
      %p121 = scmp.ne.s32.totalorder %s110, %s111
      %p122 = scmp.eq.s32.totalorder %s20, 0
      %p123 = por %p121, %p122
      %p124 = scmp.ne.s32.totalorder %s110, %s111
      %p125 = scmp.eq.s32.totalorder %s21, 3
      %p126 = por %p124, %p125
      %p128 = scmp.ne.s32.totalorder %s111, %s127
      %p129 = scmp.eq.s32.totalorder %s21, 0
      %p130 = por %p128, %p129
      %p131 = scmp.le.s32.totalorder 1, %s15
      %p132 = scmp.lt.s32.totalorder %s15, 5
      %p133 = pnand %p131, %p132
      %p134 = pneg %p133
      // Predicated region
      $region9: #{tpu_custom_call.1} parent=5 // pred_check
        _
      $region10: #{tpu_custom_call.1} parent=5 // pred_check_branch
        %136 = sbr.rel (%p133) target = $region12
      $region11: #{tpu_custom_call.1} parent=5 // pred_region
        %s137 = ssub.s32 %s15, 1
        // Predicated region
        $region13: #{tpu_custom_call.1} parent=11 // pred_check
          %p138 = pneg %p76
        $region14: #{tpu_custom_call.1} parent=11 // pred_check_branch
          %140 = sbr.rel (%p138) target = $region16
        $region15: #{tpu_custom_call.1} parent=11 // pred_region
          _
        $region16: #{tpu_custom_call.1} parent=11 // pred_fallthru
          _
        // Predicated region
        $region17: #{tpu_custom_call.1} parent=11 // pred_check
          %p141 = pneg %p97
        $region18: #{tpu_custom_call.1} parent=11 // pred_check_branch
          %143 = sbr.rel (%p141) target = $region20
        $region19: #{tpu_custom_call.1} parent=11 // pred_region
          _
        $region20: #{tpu_custom_call.1} parent=11 // pred_fallthru
          _
      $region12: #{tpu_custom_call.1} parent=5 // pred_fallthru
        _
      %p144 = scmp.lt.s32.totalorder %s15, 4
      // Predicated region
      $region21: #{tpu_custom_call.1} parent=5 // pred_check
        %p145 = pneg %p144
      $region22: #{tpu_custom_call.1} parent=5 // pred_check_branch
        %147 = sbr.rel (%p145) target = $region24
      $region23: #{tpu_custom_call.1} parent=5 // pred_region
        // Predicated region
        $region25: #{tpu_custom_call.1} parent=23 // pred_check
          %p148 = pneg %p49
        $region26: #{tpu_custom_call.1} parent=23 // pred_check_branch
          %150 = sbr.rel (%p148) target = $region28
        $region27: #{tpu_custom_call.1} parent=23 // pred_region
          %s151 = sand.u32 %s39, 1
          %s152 = scalar_lea.sflag [#allocation5], %s151
          %s153 = sand.u32 %s39, 1
          %s154 = smul.addr %s153, 64
          %s155 = scalar_lea.vmem [#allocation4], %s154
          %157 = vsyncadd %s152, 0
          %s158 = smul.addr %s22, 16
          %s159 = sadd.s32 %s23, %s158
          %s160 = smul.addr %s159, 8
          %s161 = scalar_lea.hbm %s0, %s160
          %s162 = sshll.u32 %s161, 4
          %s163 = int_to_ptr.hbm [resolvable:$true] %s162
          %s164 = sshll.u32 %s155, 4
          %s165 = int_to_ptr.vmem [resolvable:$true] %s164
          %170 = dma.hbm_to_vmem [thread:$0]  %s163, 1024, %s165, %s152, 256, 128, 8
        $region28: #{tpu_custom_call.1} parent=23 // pred_fallthru
          _
      $region24: #{tpu_custom_call.1} parent=5 // pred_fallthru
        _
      %p171 = scmp.le.s32.totalorder 1, %s15
      %p172 = scmp.lt.s32.totalorder %s15, 5
      %p173 = pnand %p171, %p172
      %p174 = pneg %p173
      // Predicated region
      $region29: #{tpu_custom_call.1} parent=5 // pred_check
        _
      $region30: #{tpu_custom_call.1} parent=5 // pred_check_branch
        %176 = sbr.rel (%p173) target = $region32
      $region31: #{tpu_custom_call.1} parent=5 // pred_region
        %s177 = ssub.s32 %s15, 1
        %s178 = sand.u32 %s42, 1
        %s179 = scalar_lea.sflag [#allocation5], %s178
        %s180 = sand.u32 %s42, 1
        %s181 = smul.addr %s180, 64
        %s182 = scalar_lea.vmem [#allocation4], %s181
        // Predicated region
        $region33: #{tpu_custom_call.1} parent=31 // pred_check
          %p183 = pneg %p55
        $region34: #{tpu_custom_call.1} parent=31 // pred_check_branch
          %185 = sbr.rel (%p183) target = $region36
        $region35: #{tpu_custom_call.1} parent=31 // pred_region
          %187 = dma.done %s179, 1024
        $region36: #{tpu_custom_call.1} parent=31 // pred_fallthru
          _
        %s188 = sand.u32 %s42, 1
        %s189 = scalar_lea.sflag [#allocation5], %s188
        %s190 = sand.u32 %s42, 1
        %s191 = smul.addr %s190, 64
        %s192 = scalar_lea.vmem [#allocation4], %s191
        %p193 = pneg %p55
        %p194 = pneg %p52
        %p195 = pneg %p76
        %p196 = pneg %p73
        %p197 = pneg %p97
        %p198 = pneg %p94
        %p199 = pneg %p123
        %p200 = pneg %p120
        %s201 = sand.u32 %s110, 1
        %s202 = scalar_lea.sflag [#allocation6], %s201
        %s203 = sand.u32 %s110, 1
        %s204 = scalar_lea.vmem [#allocation7], %s203
        %p205 = scmp.eq.s32.totalorder %s25, 0
        // Predicated region
        $region37: #{tpu_custom_call.1} parent=31 // pred_check
          %p206 = pneg %p205
        $region38: #{tpu_custom_call.1} parent=31 // pred_check_branch
          %208 = sbr.rel (%p206) target = $region40
        $region39: #{tpu_custom_call.1} parent=31 // pred_region
          %209 = vst [vmem:[#allocation2] sm:$0xff] 0.0
          %210 = vst [vmem:[#allocation2 + $0x8] sm:$0xff] 0.0
          %211 = vst [vmem:[#allocation2 + $0x10] sm:$0xff] 0.0
          %212 = vst [vmem:[#allocation2 + $0x18] sm:$0xff] 0.0
          %213 = vst [vmem:[#allocation2 + $0x20] sm:$0xff] 0.0
          %214 = vst [vmem:[#allocation2 + $0x28] sm:$0xff] 0.0
          %215 = vst [vmem:[#allocation2 + $0x30] sm:$0xff] 0.0
          %216 = vst [vmem:[#allocation2 + $0x38] sm:$0xff] 0.0
          %217 = vst [vmem:[#allocation3] sm:$0xff] -inf
          %218 = vst [vmem:[#allocation3 + $0x8] sm:$0xff] -inf
          %219 = vst [vmem:[#allocation3 + $0x10] sm:$0xff] -inf
          %220 = vst [vmem:[#allocation3 + $0x18] sm:$0xff] -inf
          %221 = vst [vmem:[#allocation3 + $0x20] sm:$0xff] -inf
          %222 = vst [vmem:[#allocation3 + $0x28] sm:$0xff] -inf
          %223 = vst [vmem:[#allocation3 + $0x30] sm:$0xff] -inf
          %224 = vst [vmem:[#allocation3 + $0x38] sm:$0xff] -inf
        $region40: #{tpu_custom_call.1} parent=31 // pred_fallthru
          _
        %v225 = vld [vmem:[#allocation2] sm:$0xff]
        %v226 = vld [vmem:[#allocation2 + $0x8] sm:$0xff]
        %v227 = vld [vmem:[#allocation2 + $0x10] sm:$0xff]
        %v228 = vld [vmem:[#allocation2 + $0x18] sm:$0xff]
        %v229 = vld [vmem:[#allocation2 + $0x20] sm:$0xff]
        %v230 = vld [vmem:[#allocation2 + $0x28] sm:$0xff]
        %v231 = vld [vmem:[#allocation2 + $0x30] sm:$0xff]
        %v232 = vld [vmem:[#allocation2 + $0x38] sm:$0xff]
        %v233 = vld [vmem:[#allocation3] sm:$0xff]
        %v234 = vld [vmem:[#allocation3 + $0x8] sm:$0xff]
        %v235 = vld [vmem:[#allocation3 + $0x10] sm:$0xff]
        %v236 = vld [vmem:[#allocation3 + $0x18] sm:$0xff]
        %v237 = vld [vmem:[#allocation3 + $0x20] sm:$0xff]
        %v238 = vld [vmem:[#allocation3 + $0x28] sm:$0xff]
        %v239 = vld [vmem:[#allocation3 + $0x30] sm:$0xff]
        %v240 = vld [vmem:[#allocation3 + $0x38] sm:$0xff]
        %v241 = vld [vmem:[%s182] sm:$0xff]
        %v242 = vld [vmem:[%s182 + $0x8] sm:$0xff]
        %v243 = vld [vmem:[%s182 + $0x10] sm:$0xff]
        %v244 = vld [vmem:[%s182 + $0x18] sm:$0xff]
        %v245 = vld [vmem:[%s182 + $0x20] sm:$0xff]
        %v246 = vld [vmem:[%s182 + $0x28] sm:$0xff]
        %v247 = vld [vmem:[%s182 + $0x30] sm:$0xff]
        %v248 = vld [vmem:[%s182 + $0x38] sm:$0xff]
        %v249 = vadd.f32 %v225, %v241
        %v250 = vadd.f32 %v226, %v242
        %v251 = vadd.f32 %v227, %v243
        %v252 = vadd.f32 %v228, %v244
        %v253 = vadd.f32 %v229, %v245
        %v254 = vadd.f32 %v230, %v246
        %v255 = vadd.f32 %v231, %v247
        %v256 = vadd.f32 %v232, %v248
        %v257 = vmax.f32 %v233, %v241
        %v258 = vmax.f32 %v234, %v242
        %v259 = vmax.f32 %v235, %v243
        %v260 = vmax.f32 %v236, %v244
        %v261 = vmax.f32 %v237, %v245
        %v262 = vmax.f32 %v238, %v246
        %v263 = vmax.f32 %v239, %v247
        %v264 = vmax.f32 %v240, %v248
        %265 = vst [vmem:[#allocation2] sm:$0xff] %v249
        %266 = vst [vmem:[#allocation2 + $0x8] sm:$0xff] %v250
        %267 = vst [vmem:[#allocation2 + $0x10] sm:$0xff] %v251
        %268 = vst [vmem:[#allocation2 + $0x18] sm:$0xff] %v252
        %269 = vst [vmem:[#allocation2 + $0x20] sm:$0xff] %v253
        %270 = vst [vmem:[#allocation2 + $0x28] sm:$0xff] %v254
        %271 = vst [vmem:[#allocation2 + $0x30] sm:$0xff] %v255
        %272 = vst [vmem:[#allocation2 + $0x38] sm:$0xff] %v256
        %273 = vst [vmem:[#allocation3] sm:$0xff] %v257
        %274 = vst [vmem:[#allocation3 + $0x8] sm:$0xff] %v258
        %275 = vst [vmem:[#allocation3 + $0x10] sm:$0xff] %v259
        %276 = vst [vmem:[#allocation3 + $0x18] sm:$0xff] %v260
        %277 = vst [vmem:[#allocation3 + $0x20] sm:$0xff] %v261
        %278 = vst [vmem:[#allocation3 + $0x28] sm:$0xff] %v262
        %279 = vst [vmem:[#allocation3 + $0x30] sm:$0xff] %v263
        %280 = vst [vmem:[#allocation3 + $0x38] sm:$0xff] %v264
        %p281 = scmp.eq.s32.totalorder %s25, 1
        // Predicated region
        $region41: #{tpu_custom_call.1} parent=31 // pred_check
          %p282 = pneg %p281
        $region42: #{tpu_custom_call.1} parent=31 // pred_check_branch
          %284 = sbr.rel (%p282) target = $region44
        $region43: #{tpu_custom_call.1} parent=31 // pred_region
          %v285 = vld [vmem:[#allocation2] sm:$0xff]
          %v286 = vld [vmem:[#allocation2 + $0x8] sm:$0xff]
          %v287 = vld [vmem:[#allocation2 + $0x10] sm:$0xff]
          %v288 = vld [vmem:[#allocation2 + $0x18] sm:$0xff]
          %v289 = vld [vmem:[#allocation2 + $0x20] sm:$0xff]
          %v290 = vld [vmem:[#allocation2 + $0x28] sm:$0xff]
          %v291 = vld [vmem:[#allocation2 + $0x30] sm:$0xff]
          %v292 = vld [vmem:[#allocation2 + $0x38] sm:$0xff]
          %293 = vadd.xlane.f32.xlu0 %v285
          %v294 = vpop.xlane.xlu0 %293
          %295 = vadd.xlane.f32.xlu0 %v286
          %v296 = vpop.xlane.xlu0 %295
          %297 = vadd.xlane.f32.xlu0 %v287
          %v298 = vpop.xlane.xlu0 %297
          %299 = vadd.xlane.f32.xlu0 %v288
          %v300 = vpop.xlane.xlu0 %299
          %301 = vadd.xlane.f32.xlu0 %v289
          %v302 = vpop.xlane.xlu0 %301
          %303 = vadd.xlane.f32.xlu0 %v290
          %v304 = vpop.xlane.xlu0 %303
          %305 = vadd.xlane.f32.xlu0 %v291
          %v306 = vpop.xlane.xlu0 %305
          %307 = vadd.xlane.f32.xlu0 %v292
          %v308 = vpop.xlane.xlu0 %307
          %v309 = vrcp.pop 256.0
          %v310 = vmul.f32 256.0, %v309
          %v311 = vsub.f32 1.0, %v310
          %v312 = vmul.f32 %v309, %v311
          %v313 = vadd.f32 %v309, %v312
          %vm314 = vweird.f32 %v309
          %v315 = vsel %vm314, %v309, %v313
          %v316 = vmul.f32 %v294, %v315
          %v317 = vmul.f32 %v296, %v315
          %v318 = vmul.f32 %v298, %v315
          %v319 = vmul.f32 %v300, %v315
          %v320 = vmul.f32 %v302, %v315
          %v321 = vmul.f32 %v304, %v315
          %v322 = vmul.f32 %v306, %v315
          %v323 = vmul.f32 %v308, %v315
          %v324 = vld [vmem:[#allocation3] sm:$0xff]
          %v325 = vld [vmem:[#allocation3 + $0x8] sm:$0xff]
          %v326 = vld [vmem:[#allocation3 + $0x10] sm:$0xff]
          %v327 = vld [vmem:[#allocation3 + $0x18] sm:$0xff]
          %v328 = vld [vmem:[#allocation3 + $0x20] sm:$0xff]
          %v329 = vld [vmem:[#allocation3 + $0x28] sm:$0xff]
          %v330 = vld [vmem:[#allocation3 + $0x30] sm:$0xff]
          %v331 = vld [vmem:[#allocation3 + $0x38] sm:$0xff]
          %332 = vmax.xlane.f32.xlu0 %v324
          %v333 = vpop.xlane.xlu0 %332
          %334 = vmax.xlane.f32.xlu0 %v325
          %v335 = vpop.xlane.xlu0 %334
          %336 = vmax.xlane.f32.xlu0 %v326
          %v337 = vpop.xlane.xlu0 %336
          %338 = vmax.xlane.f32.xlu0 %v327
          %v339 = vpop.xlane.xlu0 %338
          %340 = vmax.xlane.f32.xlu0 %v328
          %v341 = vpop.xlane.xlu0 %340
          %342 = vmax.xlane.f32.xlu0 %v329
          %v343 = vpop.xlane.xlu0 %342
          %344 = vmax.xlane.f32.xlu0 %v330
          %v345 = vpop.xlane.xlu0 %344
          %346 = vmax.xlane.f32.xlu0 %v331
          %v347 = vpop.xlane.xlu0 %346
          %v356 = vlaneseq
          %v357 = vand.u32 %v356, 127
          %v358 = vperm.slane %v316, %v357
          %v359 = vadd.s32 %v357, 4294967288
          %v360 = vperm.slane %v317, %v359
          %vm361 = vcmask 130112
          %v362 = vsel %vm361, %v360, %v358
          %v363 = vadd.s32 %v357, 4294967280
          %v364 = vperm.slane %v318, %v363
          %vm365 = vcmask 195712
          %v366 = vsel %vm365, %v364, %v362
          %v367 = vadd.s32 %v357, 4294967272
          %v368 = vperm.slane %v319, %v367
          %vm369 = vcmask 261312
          %v370 = vsel %vm369, %v368, %v366
          %v371 = vadd.s32 %v357, 4294967264
          %v372 = vperm.slane %v320, %v371
          %vm373 = vcmask 326912
          %v374 = vsel %vm373, %v372, %v370
          %v375 = vadd.s32 %v357, 4294967256
          %v376 = vperm.slane %v321, %v375
          %vm377 = vcmask 392512
          %v378 = vsel %vm377, %v376, %v374
          %v379 = vadd.s32 %v357, 4294967248
          %v380 = vperm.slane %v322, %v379
          %vm381 = vcmask 458112
          %v382 = vsel %vm381, %v380, %v378
          %v383 = vadd.s32 %v357, 4294967240
          %v384 = vperm.slane %v323, %v383
          %vm385 = vcmask 523712
          %v386 = vsel %vm385, %v384, %v382
          %v396 = vperm.slane %v333, %v357
          %v397 = vperm.slane %v335, %v359
          %v398 = vsel %vm361, %v397, %v396
          %v399 = vperm.slane %v337, %v363
          %v400 = vsel %vm365, %v399, %v398
          %v401 = vperm.slane %v339, %v367
          %v402 = vsel %vm369, %v401, %v400
          %v403 = vperm.slane %v341, %v371
          %v404 = vsel %vm373, %v403, %v402
          %v405 = vperm.slane %v343, %v375
          %v406 = vsel %vm377, %v405, %v404
          %v407 = vperm.slane %v345, %v379
          %v408 = vsel %vm381, %v407, %v406
          %v409 = vperm.slane %v347, %v383
          %v410 = vsel %vm385, %v409, %v408
          %vm412 = vcmask 1040384
          %v413 = vsel %vm412, %v386, %v410
          %v414 = vld [vmem:[%s1] sm:$0xff]
          %v415 = vld [vmem:[%s1 + $0x8] sm:$0xff]
          %v416 = vld [vmem:[%s1 + $0x10] sm:$0xff]
          %v417 = vld [vmem:[%s1 + $0x18] sm:$0xff]
          %v418 = vld [vmem:[%s1 + $0x20] sm:$0xff]
          %v419 = vld [vmem:[%s1 + $0x28] sm:$0xff]
          %v420 = vld [vmem:[%s1 + $0x30] sm:$0xff]
          %v421 = vld [vmem:[%s1 + $0x38] sm:$0xff]
          %v422 = vld [vmem:[%s2] sm:$0xf]
          %vm423 = vcmask 523264
          %v425 = vsel %vm423, %v413, 0
          %427 = vmatpush.msra.mxu0 0.0
          %428 = vmatpush.msra.mxu0 0.0
          %429 = vmatpush.msra.mxu0 0.0
          %430 = vmatpush.msra.mxu0 0.0
          %431 = vmatpush.msra.mxu0 0.0
          %432 = vmatpush.msra.mxu0 0.0
          %433 = vmatpush.msra.mxu0 0.0
          %434 = vmatpush.msra.mxu0 0.0
          %435 = vmatpush.msra.mxu0 %v421
          %436 = vmatpush.msra.mxu0 %v420
          %437 = vmatpush.msra.mxu0 %v419
          %438 = vmatpush.msra.mxu0 %v418
          %439 = vmatpush.msra.mxu0 %v417
          %440 = vmatpush.msra.mxu0 %v416
          %441 = vmatpush.msra.mxu0 %v415
          %442 = vmatpush.msra.mxu0 %v414
          %443 = vmatmul.f32.gmra.mxu0 %v425
          %v444 = vpop.f32.mrf.mxu0
          %v445 = vadd.f32 0.0, %v444
          %446 = vdwg.mxu0
          %v447 = vmax.f32 %v445, 0.0
          %vm448 = vcmask 31744
          %v450 = vsel %vm448, %v447, 0
          %vm452 = vcmask 1043456
          %v454 = vsel %vm452, %v422, 0
          %456 = vmatpush.msra.mxu0 0.0
          %457 = vmatpush.msra.mxu0 0.0
          %458 = vmatpush.msra.mxu0 0.0
          %459 = vmatpush.msra.mxu0 0.0
          %460 = vmatpush.msra.mxu0 0.0
          %461 = vmatpush.msra.mxu0 0.0
          %462 = vmatpush.msra.mxu0 0.0
          %463 = vmatpush.msra.mxu0 0.0
          %464 = vmatpush.msra.mxu0 0.0
          %465 = vmatpush.msra.mxu0 0.0
          %466 = vmatpush.msra.mxu0 0.0
          %467 = vmatpush.msra.mxu0 0.0
          %468 = vmatpush.msra.mxu0 0.0
          %469 = vmatpush.msra.mxu0 0.0
          %470 = vmatpush.msra.mxu0 0.0
          %471 = vmatpush.msra.mxu0 %v454
          %472 = vmatmul.f32.gmra.mxu0 %v450
          %v473 = vpop.f32.mrf.mxu0
          %v474 = vadd.f32 0.0, %v473
          %475 = vdwg.mxu0
          %v477 = vrot.slane %v474, 1
          %v479 = vadd.f32 %v474, %v477
          %v480 = vxor.u32 %v479, 2147483648
          %v481 = vmul.f32 %v480, 1.442695
          %v482 = vpow.pop %v481
          %v483 = vadd.f32 %v482, 1.0
          %v484 = vrcp.pop %v483
          %v485 = vmul.f32 %v483, %v484
          %v486 = vsub.f32 1.0, %v485
          %v487 = vmul.f32 %v484, %v486
          %v488 = vadd.f32 %v484, %v487
          %vm489 = vweird.f32 %v483
          %vm490 = vweird.f32 %v484
          %vm491 = vmor %vm489, %vm490
          %v492 = vsel %vm491, %v484, %v488
          %v493 = vand.u32 2147483647, %v483
          %vm494 = vcmp.eq.f32.partialorder %v493, 8.507059e+37
          %v495 = vand.u32 %v483, 2147483648
          %v496 = vor.u32 1.1754944e-38, %v495
          %v497 = vsel %vm494, %v496, %v492
          %v498 = vmul.f32 1.0, %v497
          %499 = vst [vmem:[%s204] sm:$0x1] %v498
        $region44: #{tpu_custom_call.1} parent=31 // pred_fallthru
          _
        %s500 = sand.u32 %s110, 1
        %s501 = scalar_lea.sflag [#allocation6], %s500
        %s502 = sand.u32 %s110, 1
        %s503 = scalar_lea.vmem [#allocation7], %s502
        // Predicated region
        $region45: #{tpu_custom_call.1} parent=31 // pred_check
          %p504 = pneg %p120
        $region46: #{tpu_custom_call.1} parent=31 // pred_check_branch
          %506 = sbr.rel (%p504) target = $region48
        $region47: #{tpu_custom_call.1} parent=31 // pred_region
          %508 = vsyncadd %s501, 0
          %s509 = scalar_lea.hbm %s3, %s24
          %s511 = sshll.u32 %s503, 4
          %s512 = int_to_ptr.vmem [resolvable:$true] %s511
          %s513 = sshll.u32 %s509, 4
          %s514 = int_to_ptr.hbm [resolvable:$true] %s513
          %516 = dma.vmem_to_hbm [thread:$0]  %s512, 16, %s514, %s501
        $region48: #{tpu_custom_call.1} parent=31 // pred_fallthru
          _
      $region32: #{tpu_custom_call.1} parent=5 // pred_fallthru
        _
      %p517 = scmp.le.s32.totalorder 2, %s15
      // Predicated region
      $region49: #{tpu_custom_call.1} parent=5 // pred_check
        %p518 = pneg %p517
      $region50: #{tpu_custom_call.1} parent=5 // pred_check_branch
        %520 = sbr.rel (%p518) target = $region52
      $region51: #{tpu_custom_call.1} parent=5 // pred_region
        %s521 = ssub.s32 %s15, 2
        // Predicated region
        $region53: #{tpu_custom_call.1} parent=51 // pred_check
          %p522 = pneg %p126
        $region54: #{tpu_custom_call.1} parent=51 // pred_check_branch
          %524 = sbr.rel (%p522) target = $region56
        $region55: #{tpu_custom_call.1} parent=51 // pred_region
          %s525 = sand.u32 %s111, 1
          %s526 = scalar_lea.sflag [#allocation6], %s525
          %s527 = sand.u32 %s111, 1
          %s528 = scalar_lea.vmem [#allocation7], %s527
          %530 = dma.done %s526, 16
        $region56: #{tpu_custom_call.1} parent=51 // pred_fallthru
          _
      $region52: #{tpu_custom_call.1} parent=5 // pred_fallthru
        _
    $region6: #{tpu_custom_call.1} parent=1 // loop_footer
      %s19 = sadd.s32 1, %s15
    $region7: #{tpu_custom_call.1} parent=1 // loop_footer_branch
      %14 = sbr.rel target = $region3
    $region8: #{tpu_custom_call.1} parent=1 // loop_exit
      _
    %531 = vsyncpa [#allocation5], 1
    %s532 = scalar_lea.sflag [#allocation5], 1
    %533 = vsyncpa %s532, 1
    %534 = vsyncpa [#allocation6], 1
    %s535 = scalar_lea.sflag [#allocation6], 1
    %536 = vsyncpa %s535, 1

</llo_original>
